<compile_context>
chip_gen: v7x
topology: tpu7x:2x2x1
jax: 0.10.0
libtpu: 0.0.40
codegen_flags: <defaults>
</compile_context>

<pallas_src>
import jax
import jax.numpy as jnp
from jax.experimental import pallas as pl
from jax.experimental.pallas import tpu as pltpu


def _gather_excite_kernel(x_ref, o_ref):
    # x_ref / o_ref: (ct, HW) block in VMEM, native dtype.
    x = x_ref[...]
    # Per-row (= per image*channel) global average pool over the flattened
    # spatial axis.  Accumulate in f32; do NOT materialize a full f32 tile.
    scale = jnp.mean(x, axis=-1, keepdims=True, dtype=jnp.float32)  # (ct, 1)
    scale = jax.nn.sigmoid(scale)                                   # EUP
    # Broadcast multiply in the native dtype (bf16 VALU on v6e/v7x; on v5e it
    # lowers to convert+f32 mul, fully hidden under the HBM transfer).
    o_ref[...] = (x * scale.astype(x.dtype)).astype(o_ref.dtype)


def _round_up(x: int, m: int) -> int:
    return ((x + m - 1) // m) * m


def gather_excite(
    x: jax.Array,
    *,
    target_block_bytes: int = 4 * 1024 * 1024,
    min_grid_steps: int = 8,
    donate_input: bool = False,
) -> jax.Array:
    """GatherExcite forward (default config) on NCHW input."""
    N, C, H, W = x.shape
    HW = H * W
    rows = N * C
    itemsize = jnp.dtype(x.dtype).itemsize

    # Sublane pack: 8 for 4-byte, 16 for 2-byte, 32 for 1-byte dtypes.
    pack = 8 * max(1, 4 // itemsize)

    # Lane-padded row width: VMEM rows are padded to 128 lanes, so size the
    # row tile on the padded byte footprint, not the nominal one.
    hw_pad = pl.cdiv(HW, 128) * 128

    # Row tile: multiple of `pack`, sized to ~target_block_bytes of real VMEM.
    ct = (target_block_bytes // max(1, hw_pad * itemsize)) // pack * pack
    ct = max(pack, ct)

    # Keep ~min_grid_steps pipeline steps so input DMA, compute and writeback
    # overlap (for N=1, C=512..2048 small-HW shapes a single huge block would
    # collapse the grid to 1-2 steps and expose the DMA latency).
    ct_cap = max(pack, _round_up(pl.cdiv(rows, min_grid_steps), pack))
    ct = min(ct, ct_cap)
    # Never exceed the (pack-rounded) number of rows.
    ct = min(ct, max(pack, _round_up(rows, pack)))

    grid = (pl.cdiv(rows, ct),)

    # Collapse (N, C) and flatten spatial dims -> lane-dense last axis
    # (free metadata op for contiguous NCHW).
    x_flat = x.reshape(rows, HW)

    out_flat = pl.pallas_call(
        _gather_excite_kernel,
        out_shape=jax.ShapeDtypeStruct((rows, HW), x.dtype),
        grid_spec=pltpu.PrefetchScalarGridSpec(
            num_scalar_prefetch=0,
            grid=grid,
            in_specs=[
                pl.BlockSpec((ct, HW), lambda r: (r, 0)),
            ],
            out_specs=pl.BlockSpec((ct, HW), lambda r: (r, 0)),
        ),
        compiler_params=pltpu.CompilerParams(
            dimension_semantics=("parallel",),
            # 4 buffers x ~4 MiB (padded) = ~16 MiB << 48 MiB; 48 MiB leaves
            # headroom under v7x's 64 MiB physical VMEM and is trivially safe
            # on v5e / v6e (128 MiB).
            vmem_limit_bytes=48 * 1024 * 1024,
        ),
        # Optional: let XLA reuse the input HBM buffer for the output when the
        # caller can consume x destructively (saves an N*C*H*W allocation; HBM
        # read+write traffic is unchanged).
        input_output_aliases=({0: 0} if donate_input else {}),
    )(x_flat)

    return out_flat.reshape(N, C, H, W)


def gather_excite_ref(x: jax.Array) -> jax.Array:
    """Pure-JAX reference for correctness checking."""
    scale = jnp.mean(x.astype(jnp.float32), axis=(2, 3), keepdims=True)
    return (jax.nn.sigmoid(scale).astype(x.dtype) * x).astype(x.dtype)


if __name__ == "__main__":
    key = jax.random.PRNGKey(0)

    # Small shape consistent with the module's NCHW conv/pool inputs (f32).
    x = jax.random.normal(key, (2, 4, 16, 16), dtype=jnp.float32)
    out = gather_excite(x)
    jax.block_until_ready(out)
    ref = gather_excite_ref(x)
    assert out.shape == x.shape and out.dtype == x.dtype
    assert jnp.allclose(out, ref, atol=1e-5, rtol=1e-5), "mismatch vs reference (f32)"

    # Exercise the multi-step row-tiled path (grid > 1, row tile spans channel
    # boundaries across images).
    key2, key3 = jax.random.split(jax.random.PRNGKey(0))
    x2 = jax.random.normal(key2, (2, 64, 8, 8), dtype=jnp.float32)
    out2 = gather_excite(x2)
    jax.block_until_ready(out2)
    ref2 = gather_excite_ref(x2)
    assert jnp.allclose(out2, ref2, atol=1e-5, rtol=1e-5), "mismatch vs reference (tiled rows, f32)"

    # bf16 path: f32-accumulated mean, f32 sigmoid, bf16 broadcast multiply.
    x3 = jax.random.normal(key3, (1, 32, 8, 8), dtype=jnp.bfloat16)
    out3 = gather_excite(x3)
    jax.block_until_ready(out3)
    ref3 = gather_excite_ref(x3)
    assert out3.dtype == jnp.bfloat16
    assert jnp.allclose(
        out3.astype(jnp.float32), ref3.astype(jnp.float32), atol=2e-2, rtol=2e-2
    ), "mismatch vs reference (bf16)"

    print("KERNEL_OK")
</pallas_src>

<mosaic_0001>
module attributes {stable_mosaic.version = 11 : i64} {
  func.func @_gather_excite_kernel(%arg0: i32, %arg1: memref<8x256xf32, #tpu.memory_space<vmem>>, %arg2: memref<8x256xf32, #tpu.memory_space<vmem>>) attributes {dimension_semantics = [#tpu.dimension_semantics<parallel>], iteration_bounds = array<i64: 1>, scalar_prefetch = 0 : i64, scratch_operands = 0 : i64, tpu.core_type = #tpu.core_type<tc>, window_params = [{transform_indices = @transform_0, window_bounds = array<i64: 8, 256>}, {transform_indices = @transform_1, window_bounds = array<i64: 8, 256>}]} {
    %c0 = arith.constant 0 : index
    %c0_0 = arith.constant 0 : index
    %0 = vector.load %arg1[%c0, %c0_0] : memref<8x256xf32, #tpu.memory_space<vmem>>, vector<8x256xf32>
    %cst = arith.constant dense<0.000000e+00> : vector<8xf32>
    %1 = vector.multi_reduction <add>, %0, %cst [1] : vector<8x256xf32> to vector<8xf32>
    %2 = vector.shape_cast %1 : vector<8xf32> to vector<8x1xf32>
    %cst_1 = arith.constant 2.560000e+02 : f32
    %3 = vector.broadcast %cst_1 : f32 to vector<8x1xf32>
    %4 = arith.divf %2, %3 : vector<8x1xf32>
    %5 = arith.negf %4 : vector<8x1xf32>
    %6 = math.exp %5 : vector<8x1xf32>
    %cst_2 = arith.constant 1.000000e+00 : f32
    %7 = vector.broadcast %cst_2 : f32 to vector<8x1xf32>
    %8 = arith.addf %7, %6 : vector<8x1xf32>
    %9 = arith.divf %7, %8 : vector<8x1xf32>
    %10 = vector.broadcast %9 : vector<8x1xf32> to vector<8x256xf32>
    %11 = arith.mulf %0, %10 : vector<8x256xf32>
    %c0_3 = arith.constant 0 : index
    %c0_4 = arith.constant 0 : index
    %12 = vector.load %arg2[%c0_3, %c0_4] : memref<8x256xf32, #tpu.memory_space<vmem>>, vector<8x256xf32>
    tpu.vector_store %arg2[%c0_3, %c0_4], %11 {strides = array<i32>} : memref<8x256xf32, #tpu.memory_space<vmem>>, vector<8x256xf32>,
    return
  }
  func.func @transform_0(%arg0: i32) -> (i32, i32) {
    %c0_i32 = arith.constant 0 : i32
    %c0_i32_0 = arith.constant 0 : i32
    return %arg0, %c0_i32 : i32, i32
  }
  func.func @transform_1(%arg0: i32) -> (i32, i32) {
    %c0_i32 = arith.constant 0 : i32
    %c0_i32_0 = arith.constant 0 : i32
    return %arg0, %c0_i32 : i32, i32
  }
}

</mosaic_0001>

<llo_original>
// kernel: tpu_custom_call.1
$region0: #{tpu_custom_call.1}
  #allocation0 [shape = 'u32[]', space=smem, size = 0x4, offset = 0x4, fixed_abs, tag = 'smem constant byte address 0x4 - core index']
  #allocation1 [shape = 'u32[144,128]{1,0:T(1,128)}', space=vmem, size = 0x12000, scoped, tag = 'internal scratch']
  %s0 = inlined_call_operand.hbm [shape: f32[8,256], index: 0, kind: input, shape index: {}]
  %s1 = inlined_call_operand.hbm [shape: f32[8,256], index: 1, kind: output, shape index: {}]
  %s2 = sld [smem:[#allocation0]]
  $region18: #{tpu_custom_call.1} parent=0
    _
  %s4 = ssub.s32 1, %s2
  %s5 = scalar_select 0, %s4, %s2
  $region1: #{tpu_custom_call.1} parent=0
    #allocation2 [shape = 'u8[8192]{0}', space=vmem, size = 0x2000, scoped, tag = 'input window, operand 0, single buffered']
    #allocation3 [shape = 's32[1]{0}', space=sflag, size = 0x4, scoped, tag = 'scoped memory for tpu_custom_call.1']
    #allocation4 [shape = 's32[1]{0}', space=sflag, size = 0x4, scoped, tag = 'scoped memory for tpu_custom_call.1']
    #allocation5 [shape = 'u8[8192]{0}', space=vmem, size = 0x2000, scoped, tag = 'output window, operand 0, single buffered']
    %6 = vsyncpa [#allocation3], 0
    %7 = vsyncpa [#allocation4], 0
    // Predicated region
    $region2: #{tpu_custom_call.1} parent=1 // pred_check
      _
    $region3: #{tpu_custom_call.1} parent=1 // pred_check_branch
      %9 = sbr.rel (0) target = $region5
    $region4: #{tpu_custom_call.1} parent=1 // pred_region
      %s11 = ssub.s32 256, 256
      %12 = vsyncadd [#allocation3], %s11
      %s14 = sshll.u32 [#allocation2], 4
      %s15 = int_to_ptr.vmem [resolvable:$true] %s14
      %17 = dma.hbm_to_vmem [thread:$0]  %s0, 256, %s15, [#allocation3]
    $region5: #{tpu_custom_call.1} parent=1 // pred_fallthru
      _
    // Predicated region
    $region6: #{tpu_custom_call.1} parent=1 // pred_check
      _
    $region7: #{tpu_custom_call.1} parent=1 // pred_check_branch
      %19 = sbr.rel (0) target = $region9
    $region8: #{tpu_custom_call.1} parent=1 // pred_region
      %20 = dma.done [#allocation3], 256
    $region9: #{tpu_custom_call.1} parent=1 // pred_fallthru
      _
    %v21 = vld [vmem:[#allocation2] sm:$0xff]
    %v22 = vld [vmem:[#allocation2 + $0x8] sm:$0xff]
    %v23 = vadd.f32 %v21, %v22
    %24 = vadd.xlane.f32.xlu0 %v23
    %v25 = vpop.xlane.xlu0 %24
    %v26 = vrcp.pop 256.0
    %v27 = vmul.f32 %v25, %v26
    %v28 = vxor.u32 %v27, 2147483648
    %v29 = vmul.f32 %v28, 1.442695
    %v30 = vpow.pop %v29
    %v31 = vadd.f32 %v30, 1.0
    %v32 = vrcp.pop %v31
    %v33 = vmul.f32 1.0, %v32
    %v34 = vmul.f32 %v21, %v33
    %v35 = vmul.f32 %v22, %v33
    %36 = vst [vmem:[#allocation5] sm:$0xff] %v34
    %37 = vst [vmem:[#allocation5 + $0x8] sm:$0xff] %v35
    // Predicated region
    $region10: #{tpu_custom_call.1} parent=1 // pred_check
      _
    $region11: #{tpu_custom_call.1} parent=1 // pred_check_branch
      %39 = sbr.rel (0) target = $region13
    $region12: #{tpu_custom_call.1} parent=1 // pred_region
      %s41 = ssub.s32 256, 256
      %42 = vsyncadd [#allocation4], %s41
      %s44 = sshll.u32 [#allocation5], 4
      %s45 = int_to_ptr.vmem [resolvable:$true] %s44
      %47 = dma.vmem_to_hbm [thread:$0]  %s45, 256, %s1, [#allocation4]
    $region13: #{tpu_custom_call.1} parent=1 // pred_fallthru
      _
    // Predicated region
    $region14: #{tpu_custom_call.1} parent=1 // pred_check
      _
    $region15: #{tpu_custom_call.1} parent=1 // pred_check_branch
      %49 = sbr.rel (0) target = $region17
    $region16: #{tpu_custom_call.1} parent=1 // pred_region
      %50 = dma.done [#allocation4], 256
    $region17: #{tpu_custom_call.1} parent=1 // pred_fallthru
      _
    %51 = vsyncpa [#allocation3], 1
    %52 = vsyncpa [#allocation4], 1

</llo_original>
